<compile_context>
chip_gen: v7x
topology: tpu7x:2x2x1
jax: 0.10.0
libtpu: 0.0.40
codegen_flags: <defaults>
</compile_context>

<pallas_src>
import math

import jax
import jax.numpy as jnp
import numpy as np
from jax.experimental import pallas as pl
from jax.experimental.pallas import tpu as pltpu


def _make_yukawa_tree_kernel(coupling: float, mass: float, ext_momentum: float):
    g2 = float(coupling) ** 2
    m2 = float(mass) ** 2
    p_ext = float(ext_momentum)
    e_ext = math.sqrt(p_ext * p_ext + m2)

    # Algebraically expanded on-shell propagator denominators:
    #   s: (E_i + E_ext)^2 - (p_i + p_ext)^2 - m^2 = m^2 + 2*(E_i*E_ext - p_i*p_ext)
    #   u: (E_j - E_ext)^2 - (p_j - p_ext)^2 - m^2 = m^2 - 2*(E_j*E_ext - p_j*p_ext)
    #   t: (E_i - E_j  )^2 - (p_i - p_j  )^2 - m^2 = m^2 - 2*E_i*E_j + 2*p_i*p_j
    def kernel(p_col_ref, p_row_ref, out_ref):
        p_i = p_col_ref[...]                    # (TM, 1)  column momenta
        p_j = p_row_ref[...]                    # (1, TN)  row momenta
        e_i = jnp.sqrt(p_i * p_i + m2)          # O(TM) EUP work (off dim^2 path)
        e_j = jnp.sqrt(p_j * p_j + m2)          # O(TN) EUP work

        # Row-only (s-channel) and column-only (u-channel) contributions,
        # already scaled by g^2: O(TM)+O(TN) work per tile.
        s_term = g2 / (m2 + 2.0 * (e_i * e_ext - p_i * p_ext))   # (TM, 1)
        u_term = g2 / (m2 - 2.0 * (e_j * e_ext - p_j * p_ext))   # (1, TN)

        # t-channel: the only per-element divide.
        two_e_i = 2.0 * e_i
        two_p_i = 2.0 * p_i
        t_den = m2 - two_e_i * e_j + two_p_i * p_j                # (TM, TN)
        amp = g2 / t_den + (s_term + u_term)
        out_ref[...] = jnp.abs(amp)

        # Identity only on diagonal tiles (square tiles => local diagonal
        # coincides with the global diagonal when the two block ids match).
        @pl.when(pl.program_id(0) == pl.program_id(1))
        def _():
            r = jax.lax.broadcasted_iota(jnp.int32, out_ref.shape, 0)
            c = jax.lax.broadcasted_iota(jnp.int32, out_ref.shape, 1)
            out_ref[...] = out_ref[...] + (r == c).astype(out_ref.dtype)

    return kernel


def scalar_yukawa_tree_forward(momenta: jax.Array, ext_momentum: float,
                               coupling: float, mass: float,
                               *, tile: int = 512) -> jax.Array:
    """Pallas implementation of Scalar_Yukawa_tree.forward.

    momenta: (dim,) float32 momenta.
    returns: (dim, dim) float32 scattering matrix (identity + |amplitude|).
    """
    momenta = momenta.astype(jnp.float32)
    dim = momenta.shape[0]
    t = int(min(tile, dim))                       # full-array block for small dims
    grid = (pl.cdiv(dim, t), pl.cdiv(dim, t))

    p_col = momenta.reshape(dim, 1)
    p_row = momenta.reshape(1, dim)
    kernel = _make_yukawa_tree_kernel(coupling, mass, ext_momentum)

    return pl.pallas_call(
        kernel,
        out_shape=jax.ShapeDtypeStruct((dim, dim), jnp.float32),
        grid=grid,
        in_specs=[
            pl.BlockSpec((t, 1), lambda i, j: (i, 0)),
            pl.BlockSpec((1, t), lambda i, j: (0, j)),
        ],
        out_specs=pl.BlockSpec((t, t), lambda i, j: (i, j)),
        compiler_params=pltpu.CompilerParams(
            dimension_semantics=("parallel", "parallel")),
    )(p_col, p_row)


# ----------------------------- references ---------------------------------

def _energy(p, m):
    return jnp.sqrt(p * p + m * m)


def _inner_product(p1, p2, m, add):
    e1, e2 = _energy(p1, m), _energy(p2, m)
    if add:
        return (e1 + e2) ** 2 - (p1 + p2) ** 2
    return (e1 - e2) ** 2 - (p1 - p2) ** 2


def _reference(momenta, ext_momentum, coupling, mass):
    """Vectorized pure-JAX (float32) mirror of the PyTorch double loop."""
    m = jnp.float32(mass)
    g2 = jnp.float32(coupling) ** 2
    p_ext = jnp.float32(ext_momentum)
    m2 = m * m
    p_i = momenta[:, None].astype(jnp.float32)
    p_j = momenta[None, :].astype(jnp.float32)
    s_ch = 1.0 / (_inner_product(p_i, p_ext, m, True) - m2)
    t_ch = 1.0 / (_inner_product(p_i, p_j, m, False) - m2)
    u_ch = 1.0 / (_inner_product(p_j, p_ext, m, False) - m2)
    eye = jnp.eye(momenta.shape[0], dtype=jnp.float32)
    return eye + jnp.abs(g2 * (s_ch + t_ch + u_ch))


def _reference_loop_f64(momenta, ext_momentum, coupling, mass):
    """Direct float64 transcription of the PyTorch i/j double loop."""
    dim = len(momenta)
    m = float(mass)
    g = float(coupling)
    pk = float(ext_momentum)

    def energy(p):
        return math.sqrt(p * p + m * m)

    def inner_product(p1, p2, add):
        e1, e2 = energy(p1), energy(p2)
        if add:
            return (e1 + e2) ** 2 - (p1 + p2) ** 2
        return (e1 - e2) ** 2 - (p1 - p2) ** 2

    s_channel = lambda p1, p2: 1.0 / (inner_product(p1, p2, True) - m ** 2)
    t_channel = lambda p1, p3: 1.0 / (inner_product(p1, p3, False) - m ** 2)
    u_channel = lambda p2, p3: 1.0 / (inner_product(p3, p2, False) - m ** 2)

    matrix = np.identity(dim)
    for i in range(dim):
        for j in range(dim):
            matrix[i][j] += abs(g ** 2 * (s_channel(momenta[i], pk)
                                          + t_channel(momenta[i], momenta[j])
                                          + u_channel(pk, momenta[j])))
    return matrix


if __name__ == "__main__":
    # Module-level parameters (coupling/mass are used as scalars by forward()).
    coupling = 0.3
    mass = 1.0
    ext_momenta = [0.5, 1.5]
    k = 0

    key = jax.random.PRNGKey(0)
    k_small, k_big = jax.random.split(key)

    # --- small case (single-tile path), mirrors the module at dim=8 ---------
    dim_small = 8
    momenta_small = jax.random.uniform(
        k_small, (dim_small,), dtype=jnp.float32, minval=0.5, maxval=5.0)

    out_small = scalar_yukawa_tree_forward(
        momenta_small, ext_momenta[k], coupling, mass)
    out_small = jax.block_until_ready(out_small)
    assert out_small.shape == (dim_small, dim_small)

    ref_small = _reference(momenta_small, ext_momenta[k], coupling, mass)
    assert jnp.allclose(out_small, ref_small, rtol=1e-4, atol=2e-5), \
        "mismatch vs float32 reference (small)"

    ref_loop = _reference_loop_f64(
        np.asarray(momenta_small, dtype=np.float64).tolist(),
        ext_momenta[k], coupling, mass)
    assert np.allclose(np.asarray(out_small, dtype=np.float64), ref_loop,
                       rtol=1e-4, atol=1e-4), \
        "mismatch vs float64 double-loop reference"

    # --- larger case: exercises the 2x2 tiled grid, pipelining and the
    #     diagonal-only identity gating ------------------------------------
    dim_big = 1024
    momenta_big = jax.random.uniform(
        k_big, (dim_big,), dtype=jnp.float32, minval=0.5, maxval=5.0)

    out_big = scalar_yukawa_tree_forward(
        momenta_big, ext_momenta[k], coupling, mass)
    out_big = jax.block_until_ready(out_big)
    assert out_big.shape == (dim_big, dim_big)

    ref_big = _reference(momenta_big, ext_momenta[k], coupling, mass)
    assert jnp.allclose(out_big, ref_big, rtol=1e-4, atol=2e-5), \
        "mismatch vs reference (tiled path)"

    print("KERNEL_OK")
</pallas_src>

<mosaic_0001>
module attributes {stable_mosaic.version = 11 : i64} {
  func.func @kernel(%arg0: i32, %arg1: i32, %arg2: memref<8x1xf32, #tpu.memory_space<vmem>>, %arg3: memref<1x8xf32, #tpu.memory_space<vmem>>, %arg4: memref<8x8xf32, #tpu.memory_space<vmem>>) attributes {dimension_semantics = [#tpu.dimension_semantics<parallel>, #tpu.dimension_semantics<parallel>], iteration_bounds = array<i64: 1, 1>, scalar_prefetch = 0 : i64, scratch_operands = 0 : i64, tpu.core_type = #tpu.core_type<tc>, window_params = [{transform_indices = @transform_0, window_bounds = array<i64: 8, 1>}, {transform_indices = @transform_1, window_bounds = array<i64: 1, 8>}, {transform_indices = @transform_2, window_bounds = array<i64: 8, 8>}]} {
    %c0 = arith.constant 0 : index
    %c0_0 = arith.constant 0 : index
    %0 = vector.load %arg2[%c0, %c0_0] : memref<8x1xf32, #tpu.memory_space<vmem>>, vector<8x1xf32>
    %c0_1 = arith.constant 0 : index
    %c0_2 = arith.constant 0 : index
    %1 = vector.load %arg3[%c0_1, %c0_2] : memref<1x8xf32, #tpu.memory_space<vmem>>, vector<1x8xf32>
    %2 = arith.mulf %0, %0 : vector<8x1xf32>
    %cst = arith.constant 1.000000e+00 : f32
    %3 = vector.broadcast %cst : f32 to vector<8x1xf32>
    %4 = arith.addf %2, %3 : vector<8x1xf32>
    %5 = math.sqrt %4 : vector<8x1xf32>
    %6 = arith.mulf %1, %1 : vector<1x8xf32>
    %cst_3 = arith.constant 1.000000e+00 : f32
    %7 = vector.broadcast %cst_3 : f32 to vector<1x8xf32>
    %8 = arith.addf %6, %7 : vector<1x8xf32>
    %9 = math.sqrt %8 : vector<1x8xf32>
    %cst_4 = arith.constant 1.11803401 : f32
    %10 = vector.broadcast %cst_4 : f32 to vector<8x1xf32>
    %11 = arith.mulf %5, %10 : vector<8x1xf32>
    %cst_5 = arith.constant 5.000000e-01 : f32
    %12 = vector.broadcast %cst_5 : f32 to vector<8x1xf32>
    %13 = arith.mulf %0, %12 : vector<8x1xf32>
    %14 = arith.subf %11, %13 : vector<8x1xf32>
    %cst_6 = arith.constant 2.000000e+00 : f32
    %15 = vector.broadcast %cst_6 : f32 to vector<8x1xf32>
    %16 = arith.mulf %15, %14 : vector<8x1xf32>
    %cst_7 = arith.constant 1.000000e+00 : f32
    %17 = vector.broadcast %cst_7 : f32 to vector<8x1xf32>
    %18 = arith.addf %17, %16 : vector<8x1xf32>
    %cst_8 = arith.constant 9.000000e-02 : f32
    %19 = vector.broadcast %cst_8 : f32 to vector<8x1xf32>
    %20 = arith.divf %19, %18 : vector<8x1xf32>
    %cst_9 = arith.constant 1.11803401 : f32
    %21 = vector.broadcast %cst_9 : f32 to vector<1x8xf32>
    %22 = arith.mulf %9, %21 : vector<1x8xf32>
    %cst_10 = arith.constant 5.000000e-01 : f32
    %23 = vector.broadcast %cst_10 : f32 to vector<1x8xf32>
    %24 = arith.mulf %1, %23 : vector<1x8xf32>
    %25 = arith.subf %22, %24 : vector<1x8xf32>
    %cst_11 = arith.constant 2.000000e+00 : f32
    %26 = vector.broadcast %cst_11 : f32 to vector<1x8xf32>
    %27 = arith.mulf %26, %25 : vector<1x8xf32>
    %cst_12 = arith.constant 1.000000e+00 : f32
    %28 = vector.broadcast %cst_12 : f32 to vector<1x8xf32>
    %29 = arith.subf %28, %27 : vector<1x8xf32>
    %cst_13 = arith.constant 9.000000e-02 : f32
    %30 = vector.broadcast %cst_13 : f32 to vector<1x8xf32>
    %31 = arith.divf %30, %29 : vector<1x8xf32>
    %cst_14 = arith.constant 2.000000e+00 : f32
    %32 = vector.broadcast %cst_14 : f32 to vector<8x1xf32>
    %33 = arith.mulf %32, %5 : vector<8x1xf32>
    %cst_15 = arith.constant 2.000000e+00 : f32
    %34 = vector.broadcast %cst_15 : f32 to vector<8x1xf32>
    %35 = arith.mulf %34, %0 : vector<8x1xf32>
    %36 = vector.broadcast %33 : vector<8x1xf32> to vector<8x8xf32>
    %37 = vector.broadcast %9 : vector<1x8xf32> to vector<8x8xf32>
    %38 = arith.mulf %36, %37 : vector<8x8xf32>
    %cst_16 = arith.constant 1.000000e+00 : f32
    %39 = vector.broadcast %cst_16 : f32 to vector<8x8xf32>
    %40 = arith.subf %39, %38 : vector<8x8xf32>
    %41 = vector.broadcast %35 : vector<8x1xf32> to vector<8x8xf32>
    %42 = vector.broadcast %1 : vector<1x8xf32> to vector<8x8xf32>
    %43 = arith.mulf %41, %42 : vector<8x8xf32>
    %44 = arith.addf %40, %43 : vector<8x8xf32>
    %cst_17 = arith.constant 9.000000e-02 : f32
    %45 = vector.broadcast %cst_17 : f32 to vector<8x8xf32>
    %46 = arith.divf %45, %44 : vector<8x8xf32>
    %47 = vector.broadcast %20 : vector<8x1xf32> to vector<8x8xf32>
    %48 = vector.broadcast %31 : vector<1x8xf32> to vector<8x8xf32>
    %49 = arith.addf %47, %48 : vector<8x8xf32>
    %50 = arith.addf %46, %49 : vector<8x8xf32>
    %51 = math.absf %50 : vector<8x8xf32>
    %c0_18 = arith.constant 0 : index
    %c0_19 = arith.constant 0 : index
    %52 = vector.load %arg4[%c0_18, %c0_19] : memref<8x8xf32, #tpu.memory_space<vmem>>, vector<8x8xf32>
    tpu.vector_store %arg4[%c0_18, %c0_19], %51 {strides = array<i32>} : memref<8x8xf32, #tpu.memory_space<vmem>>, vector<8x8xf32>,
    %53 = arith.cmpi eq, %arg0, %arg1 : i32
    %54 = arith.extui %53 : i1 to i32
    %c0_i32 = arith.constant 0 : i32
    %55 = arith.cmpi ne, %54, %c0_i32 : i32
    scf.if %55 {
      %56 = tpu.iota {dimensions = array<i32: 0>} : vector<8x8xi32>
      %57 = tpu.iota {dimensions = array<i32: 1>} : vector<8x8xi32>
      %c0_20 = arith.constant 0 : index
      %c0_21 = arith.constant 0 : index
      %58 = vector.load %arg4[%c0_20, %c0_21] : memref<8x8xf32, #tpu.memory_space<vmem>>, vector<8x8xf32>
      %59 = arith.cmpi eq, %56, %57 : vector<8x8xi32>
      %60 = arith.extui %59 : vector<8x8xi1> to vector<8x8xi32>
      %61 = arith.sitofp %60 : vector<8x8xi32> to vector<8x8xf32>
      %62 = arith.addf %58, %61 : vector<8x8xf32>
      %c0_22 = arith.constant 0 : index
      %c0_23 = arith.constant 0 : index
      %63 = vector.load %arg4[%c0_22, %c0_23] : memref<8x8xf32, #tpu.memory_space<vmem>>, vector<8x8xf32>
      tpu.vector_store %arg4[%c0_22, %c0_23], %62 {strides = array<i32>} : memref<8x8xf32, #tpu.memory_space<vmem>>, vector<8x8xf32>,
    } else {
    }
    return
  }
  func.func @transform_0(%arg0: i32, %arg1: i32) -> (i32, i32) {
    %c0_i32 = arith.constant 0 : i32
    %c0_i32_0 = arith.constant 0 : i32
    return %arg0, %c0_i32 : i32, i32
  }
  func.func @transform_1(%arg0: i32, %arg1: i32) -> (i32, i32) {
    %c0_i32 = arith.constant 0 : i32
    %c0_i32_0 = arith.constant 0 : i32
    return %c0_i32, %arg1 : i32, i32
  }
  func.func @transform_2(%arg0: i32, %arg1: i32) -> (i32, i32) {
    %c0_i32 = arith.constant 0 : i32
    return %arg0, %arg1 : i32, i32
  }
}

</mosaic_0001>

<llo_original>
// kernel: tpu_custom_call.1
$region0: #{tpu_custom_call.1}
  #allocation0 [shape = 'u32[]', space=smem, size = 0x4, offset = 0x4, fixed_abs, tag = 'smem constant byte address 0x4 - core index']
  #allocation1 [shape = 'u32[144,128]{1,0:T(1,128)}', space=vmem, size = 0x12000, scoped, tag = 'internal scratch']
  %s0 = inlined_call_operand.vmem [shape: f32[8,1], index: 0, kind: input, shape index: {}]
  %s1 = inlined_call_operand.vmem [shape: f32[1,8], index: 1, kind: input, shape index: {}]
  %s2 = inlined_call_operand.hbm [shape: f32[8,8], index: 2, kind: output, shape index: {}]
  %s3 = sld [smem:[#allocation0]]
  $region22: #{tpu_custom_call.1} parent=0
    _
  %s5 = ssub.s32 1, %s3
  %s6 = scalar_select 0, %s5, %s3
  $region1: #{tpu_custom_call.1} parent=0
    #allocation2 [shape = 'u8[4096]{0}', space=vmem, size = 0x1000, scoped, tag = 'output window, operand 0, single buffered']
    #allocation3 [shape = 's32[1]{0}', space=sflag, size = 0x4, scoped, tag = 'scoped memory for tpu_custom_call.1']
    %7 = vsyncpa [#allocation3], 0
    // Predicated region
    $region2: #{tpu_custom_call.1} parent=1 // pred_check
      _
    $region3: #{tpu_custom_call.1} parent=1 // pred_check_branch
      %9 = sbr.rel (0) target = $region5
    $region4: #{tpu_custom_call.1} parent=1 // pred_region
      _
    $region5: #{tpu_custom_call.1} parent=1 // pred_fallthru
      _
    // Predicated region
    $region6: #{tpu_custom_call.1} parent=1 // pred_check
      _
    $region7: #{tpu_custom_call.1} parent=1 // pred_check_branch
      %11 = sbr.rel (0) target = $region9
    $region8: #{tpu_custom_call.1} parent=1 // pred_region
      _
    $region9: #{tpu_custom_call.1} parent=1 // pred_fallthru
      _
    %v12 = vld [vmem:[%s0] sm:$0xff]
    %v13 = vld [vmem:[%s1] sm:$0x1]
    %v14 = vmul.f32 %v12, %v12
    %v15 = vadd.f32 %v14, 1.0
    %v16 = vrsqrt.pop %v15
    %v17 = vmul.f32 %v15, %v16
    %vm18 = vcmp.eq.f32.partialorder %v15, inf
    %v19 = vsel %vm18, %v15, %v17
    %vm20 = vcmp.eq.f32.partialorder %v15, 0.0
    %v21 = vand.u32 %v15, 2147483648
    %v22 = vsel %vm20, %v21, %v19
    %v23 = vmul.f32 %v13, %v13
    %v24 = vadd.f32 %v23, 1.0
    %v25 = vrsqrt.pop %v24
    %v26 = vmul.f32 %v24, %v25
    %vm27 = vcmp.eq.f32.partialorder %v24, inf
    %v28 = vsel %vm27, %v24, %v26
    %vm29 = vcmp.eq.f32.partialorder %v24, 0.0
    %v30 = vand.u32 %v24, 2147483648
    %v31 = vsel %vm29, %v30, %v28
    %v32 = vmul.f32 %v22, 1.118034
    %v33 = vmul.f32 %v12, 0.5
    %v34 = vsub.f32 %v32, %v33
    %v35 = vmul.f32 %v34, 2.0
    %v36 = vadd.f32 %v35, 1.0
    %v37 = vrcp.pop %v36
    %v38 = vmul.f32 0.09, %v37
    %v39 = vmul.f32 %v31, 1.118034
    %v40 = vmul.f32 %v13, 0.5
    %v41 = vsub.f32 %v39, %v40
    %v42 = vmul.f32 %v41, 2.0
    %v43 = vsub.f32 1.0, %v42
    %v44 = vrcp.pop %v43
    %v45 = vmul.f32 0.09, %v44
    %v46 = vmul.f32 %v22, 2.0
    %v47 = vmul.f32 %v12, 2.0
    %49 = vset.pattern.permute.xlu0 0
    %50 = vperm.xlu0 %49, %v46
    %v51 = vpop.permute.xlu0 %50
    %v54 = vlaneseq
    %v55 = vshrl.u32 %v54, 7
    %v56 = vsub.s32 0, %v55
    %v57 = vrot.slane %v31, %v56
    %v59 = vmul.f32 %v51, %v57
    %v60 = vsub.f32 1.0, %v59
    %62 = vset.pattern.permute.xlu0 0
    %63 = vperm.xlu0 %62, %v47
    %v64 = vpop.permute.xlu0 %63
    %v67 = vlaneseq
    %v68 = vshrl.u32 %v67, 7
    %v69 = vsub.s32 0, %v68
    %v70 = vrot.slane %v13, %v69
    %v72 = vmul.f32 %v64, %v70
    %v73 = vadd.f32 %v60, %v72
    %v74 = vrcp.pop %v73
    %v75 = vmul.f32 0.09, %v74
    %77 = vset.pattern.permute.xlu0 0
    %78 = vperm.xlu0 %77, %v38
    %v79 = vpop.permute.xlu0 %78
    %v82 = vlaneseq
    %v83 = vshrl.u32 %v82, 7
    %v84 = vsub.s32 0, %v83
    %v85 = vrot.slane %v45, %v84
    %v87 = vadd.f32 %v79, %v85
    %v88 = vadd.f32 %v75, %v87
    %v89 = vand.u32 2147483647, %v88
    %vm90 = vcmask 64512
    %91 = vst.msk [vmem:[#allocation2] sm:$0xff] %vm90, %v89
    %p92 = scmp.eq.s32.totalorder 0, 0
    // Predicated region
    $region10: #{tpu_custom_call.1} parent=1 // pred_check
      %p93 = pneg %p92
    $region11: #{tpu_custom_call.1} parent=1 // pred_check_branch
      %95 = sbr.rel (%p93) target = $region13
    $region12: #{tpu_custom_call.1} parent=1 // pred_region
      %v96 = vlaneseq
      %v97 = vshrl.u32 %v96, 7
      %v98 = vlaneseq
      %v99 = vand.u32 %v98, 127
      %v100 = vld [vmem:[#allocation2] sm:$0xff]
      %vm101 = vcmp.eq.s32.totalorder %v97, %v99
      %v102 = vsel %vm101, 1, 0
      %v103 = vcvt.s32.f32 %v102
      %v104 = vadd.f32 %v100, %v103
      %105 = vst.msk [vmem:[#allocation2] sm:$0xff] %vm90, %v104
    $region13: #{tpu_custom_call.1} parent=1 // pred_fallthru
      _
    // Predicated region
    $region14: #{tpu_custom_call.1} parent=1 // pred_check
      _
    $region15: #{tpu_custom_call.1} parent=1 // pred_check_branch
      %107 = sbr.rel (0) target = $region17
    $region16: #{tpu_custom_call.1} parent=1 // pred_region
      %s109 = ssub.s32 128, 128
      %110 = vsyncadd [#allocation3], %s109
      %s112 = sshll.u32 [#allocation2], 4
      %s113 = int_to_ptr.vmem [resolvable:$true] %s112
      %115 = dma.vmem_to_hbm [thread:$0]  %s113, 128, %s2, [#allocation3]
    $region17: #{tpu_custom_call.1} parent=1 // pred_fallthru
      _
    // Predicated region
    $region18: #{tpu_custom_call.1} parent=1 // pred_check
      _
    $region19: #{tpu_custom_call.1} parent=1 // pred_check_branch
      %117 = sbr.rel (0) target = $region21
    $region20: #{tpu_custom_call.1} parent=1 // pred_region
      %118 = dma.done [#allocation3], 128
    $region21: #{tpu_custom_call.1} parent=1 // pred_fallthru
      _
    %119 = vsyncpa [#allocation3], 1

</llo_original>
